<compile_context>
chip_gen: v7x
topology: tpu7x:2x2x1
jax: 0.10.0
libtpu: 0.0.40
codegen_flags: <defaults>
</compile_context>

<pallas_src>
import functools

import jax
import jax.numpy as jnp
from jax.experimental import pallas as pl
from jax.experimental.pallas import tpu as pltpu


def _mlp_kernel(x_ref, w1_ref, b1_ref, w2_ref, b2_ref, o_ref):
    # fc1: [TB, K] @ [K, H] + [1, H], ReLU
    h = jnp.dot(x_ref[...], w1_ref[...], preferred_element_type=jnp.float32)
    h = jnp.maximum(h + b1_ref[...], 0.0)
    # fc2: [TB, H] @ [H, O] + [1, O]
    y = jnp.dot(h, w2_ref[...], preferred_element_type=jnp.float32)
    o_ref[...] = (y + b2_ref[...]).astype(o_ref.dtype)


def _round_up(n, m):
    return ((n + m - 1) // m) * m


def _run_mlp(x, w1, b1, w2, b2, *, tb):
    """pallas_call on (possibly lane-packed) operands. x: [B, K]."""
    B, K = x.shape
    H = w1.shape[1]
    O = w2.shape[1]

    # Batch tile: multiple of 8 (sublanes), capped at the padded batch.
    TB = min(tb, _round_up(B, 8))
    TB = _round_up(TB, 8)
    B_pad = _round_up(B, TB)
    if B_pad != B:
        x = jnp.pad(x, ((0, B_pad - B), (0, 0)))

    grid = (B_pad // TB,)

    flops = 2 * B_pad * (K * H + H * O)
    bytes_accessed = 4 * (
        B_pad * K               # x in
        + K * H + H             # w1, b1
        + H * O + O             # w2, b2
        + B_pad * O             # out
    )

    out_pad = pl.pallas_call(
        _mlp_kernel,
        out_shape=jax.ShapeDtypeStruct((B_pad, O), x.dtype),
        grid_spec=pl.GridSpec(
            grid=grid,
            in_specs=[
                pl.BlockSpec((TB, K), lambda i: (i, 0)),   # x: tiled over batch
                pl.BlockSpec((K, H), lambda i: (0, 0)),    # w1: resident
                pl.BlockSpec((1, H), lambda i: (0, 0)),    # b1: resident
                pl.BlockSpec((H, O), lambda i: (0, 0)),    # w2: resident
                pl.BlockSpec((1, O), lambda i: (0, 0)),    # b2: resident
            ],
            out_specs=pl.BlockSpec((TB, O), lambda i: (i, 0)),
        ),
        compiler_params=pltpu.CompilerParams(
            dimension_semantics=("parallel",),  # shard batch tiles across TCs (v7x)
        ),
        cost_estimate=pl.CostEstimate(
            flops=flops, transcendentals=0, bytes_accessed=bytes_accessed
        ),
    )(x, w1, b1, w2, b2)

    return out_pad[:B]


def traffic_mlp(x, w1, b1, w2, b2, *, tb=512):
    """Forward pass of TrafficMLP: relu(x @ w1 + b1) @ w2 + b2.

    x  : [B, input_size]             float32
    w1 : [input_size, hidden_size]   (transpose of PyTorch fc1.weight)
    b1 : [1, hidden_size]
    w2 : [hidden_size, output_size]  (transpose of PyTorch fc2.weight)
    b2 : [1, output_size]
    returns [B, output_size] float32
    """
    B, in_size = x.shape
    hidden = w1.shape[1]
    out_size = w2.shape[1]

    if in_size < 128 and 128 % in_size == 0:
        # Lane-dense path: fold P rows into the 128-lane axis.
        P = 128 // in_size
        n_grp = -(-B // P)               # cdiv
        B_pad = n_grp * P
        if B_pad != B:
            x = jnp.pad(x, ((0, B_pad - B), (0, 0)))
        # [B_pad, in] row-major -> [n_grp, P*in] is a contiguous (free) reshape.
        x_pk = x.reshape(n_grp, P * in_size)
        eye = jnp.eye(P, dtype=w1.dtype)
        w1_pk = jnp.kron(eye, w1)        # [P*in, P*hidden], block-diagonal
        w2_pk = jnp.kron(eye, w2)        # [P*hidden, P*out], block-diagonal
        b1_pk = jnp.tile(b1, (1, P))     # [1, P*hidden]
        b2_pk = jnp.tile(b2, (1, P))     # [1, P*out]
        out_pk = _run_mlp(x_pk, w1_pk, b1_pk, w2_pk, b2_pk, tb=tb)
        # [n_grp, P*out] -> [B_pad, out] is again a contiguous reshape.
        return out_pk.reshape(B_pad, out_size)[:B]

    # TODO(synk): for input widths that don't divide 128 the lane-dense repack
    # would need padding of the feature axis; fall back to the direct layout.
    return _run_mlp(x, w1, b1, w2, b2, tb=tb)


def _ref_forward(x, w1, b1, w2, b2):
    h = jnp.maximum(x @ w1 + b1, 0.0)
    return h @ w2 + b2


if __name__ == "__main__":
    # Small shapes consistent with the module: Linear(input_size, hidden_size),
    # Linear(hidden_size, output_size). Batch chosen not divisible by 8 to
    # exercise the padding + packing path.
    batch = 20
    input_size = 16
    hidden_size = 32
    output_size = 4

    key = jax.random.PRNGKey(0)
    kx, kw1, kb1, kw2, kb2 = jax.random.split(key, 5)

    x = jax.random.normal(kx, (batch, input_size), dtype=jnp.float32)
    bound1 = 1.0 / (input_size ** 0.5)
    bound2 = 1.0 / (hidden_size ** 0.5)
    w1 = jax.random.uniform(kw1, (input_size, hidden_size),
                            minval=-bound1, maxval=bound1, dtype=jnp.float32)
    b1 = jax.random.uniform(kb1, (1, hidden_size),
                            minval=-bound1, maxval=bound1, dtype=jnp.float32)
    w2 = jax.random.uniform(kw2, (hidden_size, output_size),
                            minval=-bound2, maxval=bound2, dtype=jnp.float32)
    b2 = jax.random.uniform(kb2, (1, output_size),
                            minval=-bound2, maxval=bound2, dtype=jnp.float32)

    fwd = jax.jit(functools.partial(traffic_mlp, tb=8))  # small tile for toy batch
    out = fwd(x, w1, b1, w2, b2)
    jax.block_until_ready(out)

    ref = _ref_forward(x, w1, b1, w2, b2)
    assert out.shape == (batch, output_size), out.shape
    assert jnp.allclose(out, ref, atol=1e-5, rtol=1e-5), "mismatch vs reference"

    print("KERNEL_OK")
</pallas_src>

<mosaic_0001>
module attributes {stable_mosaic.version = 11 : i64} {
  func.func @_mlp_kernel(%arg0: i32, %arg1: memref<8x128xf32, #tpu.memory_space<vmem>>, %arg2: memref<128x256xf32, #tpu.memory_space<vmem>>, %arg3: memref<1x256xf32, #tpu.memory_space<vmem>>, %arg4: memref<256x32xf32, #tpu.memory_space<vmem>>, %arg5: memref<1x32xf32, #tpu.memory_space<vmem>>, %arg6: memref<8x32xf32, #tpu.memory_space<vmem>>) attributes {dimension_semantics = [#tpu.dimension_semantics<parallel>], iteration_bounds = array<i64: 1>, scalar_prefetch = 0 : i64, scratch_operands = 0 : i64, tpu.core_type = #tpu.core_type<tc>, window_params = [{transform_indices = @transform_0, window_bounds = array<i64: 8, 128>}, {pipeline_mode = #tpu.pipeline_mode<synchronous>, transform_indices = @transform_1, window_bounds = array<i64: 128, 256>}, {pipeline_mode = #tpu.pipeline_mode<synchronous>, transform_indices = @transform_2, window_bounds = array<i64: 1, 256>}, {pipeline_mode = #tpu.pipeline_mode<synchronous>, transform_indices = @transform_3, window_bounds = array<i64: 256, 32>}, {pipeline_mode = #tpu.pipeline_mode<synchronous>, transform_indices = @transform_4, window_bounds = array<i64: 1, 32>}, {transform_indices = @transform_5, window_bounds = array<i64: 8, 32>}]} {
    %c0 = arith.constant 0 : index
    %c0_0 = arith.constant 0 : index
    %0 = vector.load %arg1[%c0, %c0_0] : memref<8x128xf32, #tpu.memory_space<vmem>>, vector<8x128xf32>
    %c0_1 = arith.constant 0 : index
    %c0_2 = arith.constant 0 : index
    %1 = vector.load %arg2[%c0_1, %c0_2] : memref<128x256xf32, #tpu.memory_space<vmem>>, vector<128x256xf32>
    %cst = arith.constant dense<0.000000e+00> : vector<8x256xf32>
    %2 = tpu.matmul %0, %1, %cst {dimension_numbers = #tpu.dot_dimension_numbers<[1], [0], [0], [1], [0, 0, 1, 1], [], []>} : vector<8x128xf32>, vector<128x256xf32>, vector<8x256xf32> -> vector<8x256xf32>
    %c0_3 = arith.constant 0 : index
    %c0_4 = arith.constant 0 : index
    %3 = vector.load %arg3[%c0_3, %c0_4] : memref<1x256xf32, #tpu.memory_space<vmem>>, vector<1x256xf32>
    %4 = vector.broadcast %3 : vector<1x256xf32> to vector<8x256xf32>
    %5 = arith.addf %2, %4 : vector<8x256xf32>
    %cst_5 = arith.constant 0.000000e+00 : f32
    %6 = vector.broadcast %cst_5 : f32 to vector<8x256xf32>
    %7 = arith.maximumf %5, %6 : vector<8x256xf32>
    %c0_6 = arith.constant 0 : index
    %c0_7 = arith.constant 0 : index
    %8 = vector.load %arg4[%c0_6, %c0_7] : memref<256x32xf32, #tpu.memory_space<vmem>>, vector<256x32xf32>
    %cst_8 = arith.constant dense<0.000000e+00> : vector<8x32xf32>
    %9 = tpu.matmul %7, %8, %cst_8 {dimension_numbers = #tpu.dot_dimension_numbers<[1], [0], [0], [1], [0, 0, 1, 1], [], []>} : vector<8x256xf32>, vector<256x32xf32>, vector<8x32xf32> -> vector<8x32xf32>
    %c0_9 = arith.constant 0 : index
    %c0_10 = arith.constant 0 : index
    %10 = vector.load %arg5[%c0_9, %c0_10] : memref<1x32xf32, #tpu.memory_space<vmem>>, vector<1x32xf32>
    %11 = vector.broadcast %10 : vector<1x32xf32> to vector<8x32xf32>
    %12 = arith.addf %9, %11 : vector<8x32xf32>
    %c0_11 = arith.constant 0 : index
    %c0_12 = arith.constant 0 : index
    %13 = vector.load %arg6[%c0_11, %c0_12] : memref<8x32xf32, #tpu.memory_space<vmem>>, vector<8x32xf32>
    tpu.vector_store %arg6[%c0_11, %c0_12], %12 {strides = array<i32>} : memref<8x32xf32, #tpu.memory_space<vmem>>, vector<8x32xf32>,
    return
  }
  func.func @transform_0(%arg0: i32) -> (i32, i32) {
    %c0_i32 = arith.constant 0 : i32
    %c0_i32_0 = arith.constant 0 : i32
    return %arg0, %c0_i32 : i32, i32
  }
  func.func @transform_1(%arg0: i32) -> (i32, i32) {
    %c0_i32 = arith.constant 0 : i32
    %c0_i32_0 = arith.constant 0 : i32
    %c0_i32_1 = arith.constant 0 : i32
    return %c0_i32, %c0_i32_0 : i32, i32
  }
  func.func @transform_2(%arg0: i32) -> (i32, i32) {
    %c0_i32 = arith.constant 0 : i32
    %c0_i32_0 = arith.constant 0 : i32
    %c0_i32_1 = arith.constant 0 : i32
    return %c0_i32, %c0_i32_0 : i32, i32
  }
  func.func @transform_3(%arg0: i32) -> (i32, i32) {
    %c0_i32 = arith.constant 0 : i32
    %c0_i32_0 = arith.constant 0 : i32
    %c0_i32_1 = arith.constant 0 : i32
    return %c0_i32, %c0_i32_0 : i32, i32
  }
  func.func @transform_4(%arg0: i32) -> (i32, i32) {
    %c0_i32 = arith.constant 0 : i32
    %c0_i32_0 = arith.constant 0 : i32
    %c0_i32_1 = arith.constant 0 : i32
    return %c0_i32, %c0_i32_0 : i32, i32
  }
  func.func @transform_5(%arg0: i32) -> (i32, i32) {
    %c0_i32 = arith.constant 0 : i32
    %c0_i32_0 = arith.constant 0 : i32
    return %arg0, %c0_i32 : i32, i32
  }
}

</mosaic_0001>

<llo_original>
// kernel: traffic_mlp.1
$region0: #{traffic_mlp.1}
  #allocation0 [shape = 'u32[]', space=smem, size = 0x4, offset = 0x4, fixed_abs, tag = 'smem constant byte address 0x4 - core index']
  #allocation1 [shape = 'u32[144,128]{1,0:T(1,128)}', space=vmem, size = 0x12000, scoped, tag = 'internal scratch']
  %s0 = inlined_call_operand.vmem [shape: f32[8,128], index: 0, kind: input, shape index: {}]
  %s1 = inlined_call_operand.vmem [shape: f32[128,256], index: 1, kind: input, shape index: {}]
  %s2 = inlined_call_operand.vmem [shape: f32[1,256], index: 2, kind: input, shape index: {}]
  %s3 = inlined_call_operand.vmem [shape: f32[256,32], index: 3, kind: input, shape index: {}]
  %s4 = inlined_call_operand.vmem [shape: f32[1,32], index: 4, kind: input, shape index: {}]
  %s5 = inlined_call_operand.vmem [shape: f32[8,32], index: 5, kind: output, shape index: {}]
  %s6 = sld [smem:[#allocation0]]
  $region30: #{traffic_mlp.1} parent=0
    _
  %s8 = ssub.s32 1, %s6
  %s9 = scalar_select 0, %s8, %s6
  // Predicated region
  $region2: #{traffic_mlp.1} parent=0 // pred_check
    _
  $region3: #{traffic_mlp.1} parent=0 // pred_check_branch
    %11 = sbr.rel (0) target = $region5
  $region4: #{traffic_mlp.1} parent=0 // pred_region
    _
  $region5: #{traffic_mlp.1} parent=0 // pred_fallthru
    _
  // Predicated region
  $region6: #{traffic_mlp.1} parent=0 // pred_check
    _
  $region7: #{traffic_mlp.1} parent=0 // pred_check_branch
    %13 = sbr.rel (0) target = $region9
  $region8: #{traffic_mlp.1} parent=0 // pred_region
    _
  $region9: #{traffic_mlp.1} parent=0 // pred_fallthru
    _
  // Predicated region
  $region10: #{traffic_mlp.1} parent=0 // pred_check
    _
  $region11: #{traffic_mlp.1} parent=0 // pred_check_branch
    %15 = sbr.rel (0) target = $region13
  $region12: #{traffic_mlp.1} parent=0 // pred_region
    _
  $region13: #{traffic_mlp.1} parent=0 // pred_fallthru
    _
  // Predicated region
  $region14: #{traffic_mlp.1} parent=0 // pred_check
    _
  $region15: #{traffic_mlp.1} parent=0 // pred_check_branch
    %17 = sbr.rel (0) target = $region17
  $region16: #{traffic_mlp.1} parent=0 // pred_region
    _
  $region17: #{traffic_mlp.1} parent=0 // pred_fallthru
    _
  // Predicated region
  $region18: #{traffic_mlp.1} parent=0 // pred_check
    _
  $region19: #{traffic_mlp.1} parent=0 // pred_check_branch
    %19 = sbr.rel (0) target = $region21
  $region20: #{traffic_mlp.1} parent=0 // pred_region
    _
  $region21: #{traffic_mlp.1} parent=0 // pred_fallthru
    _
  %v20 = vld [vmem:[%s0] sm:$0xff]
  %v21 = vld [vmem:[%s1] sm:$0xff]
  %v22 = vld [vmem:[%s1 + $0x8] sm:$0xff]
  %v23 = vld [vmem:[%s1 + $0x10] sm:$0xff]
  %v24 = vld [vmem:[%s1 + $0x18] sm:$0xff]
  %v25 = vld [vmem:[%s1 + $0x20] sm:$0xff]
  %v26 = vld [vmem:[%s1 + $0x28] sm:$0xff]
  %v27 = vld [vmem:[%s1 + $0x30] sm:$0xff]
  %v28 = vld [vmem:[%s1 + $0x38] sm:$0xff]
  %v29 = vld [vmem:[%s1 + $0x40] sm:$0xff]
  %v30 = vld [vmem:[%s1 + $0x48] sm:$0xff]
  %v31 = vld [vmem:[%s1 + $0x50] sm:$0xff]
  %v32 = vld [vmem:[%s1 + $0x58] sm:$0xff]
  %v33 = vld [vmem:[%s1 + $0x60] sm:$0xff]
  %v34 = vld [vmem:[%s1 + $0x68] sm:$0xff]
  %v35 = vld [vmem:[%s1 + $0x70] sm:$0xff]
  %v36 = vld [vmem:[%s1 + $0x78] sm:$0xff]
  %v37 = vld [vmem:[%s1 + $0x80] sm:$0xff]
  %v38 = vld [vmem:[%s1 + $0x88] sm:$0xff]
  %v39 = vld [vmem:[%s1 + $0x90] sm:$0xff]
  %v40 = vld [vmem:[%s1 + $0x98] sm:$0xff]
  %v41 = vld [vmem:[%s1 + $0xa0] sm:$0xff]
  %v42 = vld [vmem:[%s1 + $0xa8] sm:$0xff]
  %v43 = vld [vmem:[%s1 + $0xb0] sm:$0xff]
  %v44 = vld [vmem:[%s1 + $0xb8] sm:$0xff]
  %v45 = vld [vmem:[%s1 + $0xc0] sm:$0xff]
  %v46 = vld [vmem:[%s1 + $0xc8] sm:$0xff]
  %v47 = vld [vmem:[%s1 + $0xd0] sm:$0xff]
  %v48 = vld [vmem:[%s1 + $0xd8] sm:$0xff]
  %v49 = vld [vmem:[%s1 + $0xe0] sm:$0xff]
  %v50 = vld [vmem:[%s1 + $0xe8] sm:$0xff]
  %v51 = vld [vmem:[%s1 + $0xf0] sm:$0xff]
  %v52 = vld [vmem:[%s1 + $0xf8] sm:$0xff]
  %v53 = vld [vmem:[%s2] sm:$0x3]
  %v55 = vlaneseq
  %v56 = vshrl.u32 %v55, 7
  %v57 = vsub.s32 0, %v56
  %v58 = vrot.slane %v53, %v57
  %v59 = vlaneseq
  %v60 = vshrl.u32 %v59, 7
  %v61 = vsub.s32 1, %v60
  %v62 = vrot.slane %v53, %v61
  %65 = vmatprep.subr.mxu0 %v22
  %66 = vmatpush1.msra.mxu0 %v21
  %67 = vmatprep.subr.mxu0 %v24
  %68 = vmatpush1.msra.mxu0 %v23
  %69 = vmatprep.subr.mxu0 %v26
  %70 = vmatpush1.msra.mxu0 %v25
  %71 = vmatprep.subr.mxu0 %v28
  %72 = vmatpush1.msra.mxu0 %v27
  %73 = vmatprep.subr.mxu0 %v30
  %74 = vmatpush1.msra.mxu0 %v29
  %75 = vmatprep.subr.mxu0 %v32
  %76 = vmatpush1.msra.mxu0 %v31
  %77 = vmatprep.subr.mxu0 %v34
  %78 = vmatpush1.msra.mxu0 %v33
  %79 = vmatprep.subr.mxu0 %v36
  %80 = vmatpush1.msra.mxu0 %v35
  %81 = vmatprep.subr.mxu0 %v38
  %82 = vmatpush1.msra.mxu0 %v37
  %83 = vmatprep.subr.mxu0 %v40
  %84 = vmatpush1.msra.mxu0 %v39
  %85 = vmatprep.subr.mxu0 %v42
  %86 = vmatpush1.msra.mxu0 %v41
  %87 = vmatprep.subr.mxu0 %v44
  %88 = vmatpush1.msra.mxu0 %v43
  %89 = vmatprep.subr.mxu0 %v46
  %90 = vmatpush1.msra.mxu0 %v45
  %91 = vmatprep.subr.mxu0 %v48
  %92 = vmatpush1.msra.mxu0 %v47
  %93 = vmatprep.subr.mxu0 %v50
  %94 = vmatpush1.msra.mxu0 %v49
  %95 = vmatprep.subr.mxu0 %v52
  %96 = vmatpush1.msra.mxu0 %v51
  %97 = vmatprep.subr.mxu0 0.0
  %98 = vmatpush1.msra.mxu0 0.0
  %99 = vmatprep.subr.mxu0 0.0
  %100 = vmatpush1.msra.mxu0 0.0
  %101 = vmatprep.subr.mxu0 0.0
  %102 = vmatpush1.msra.mxu0 0.0
  %103 = vmatprep.subr.mxu0 0.0
  %104 = vmatpush1.msra.mxu0 0.0
  %105 = vmatprep.subr.mxu0 0.0
  %106 = vmatpush1.msra.mxu0 0.0
  %107 = vmatprep.subr.mxu0 0.0
  %108 = vmatpush1.msra.mxu0 0.0
  %109 = vmatprep.subr.mxu0 0.0
  %110 = vmatpush1.msra.mxu0 0.0
  %111 = vmatprep.subr.mxu0 0.0
  %112 = vmatpush1.msra.mxu0 0.0
  %113 = vmatprep.subr.mxu0 0.0
  %114 = vmatpush1.msra.mxu0 0.0
  %115 = vmatprep.subr.mxu0 0.0
  %116 = vmatpush1.msra.mxu0 0.0
  %117 = vmatprep.subr.mxu0 0.0
  %118 = vmatpush1.msra.mxu0 0.0
  %119 = vmatprep.subr.mxu0 0.0
  %120 = vmatpush1.msra.mxu0 0.0
  %121 = vmatprep.subr.mxu0 0.0
  %122 = vmatpush1.msra.mxu0 0.0
  %123 = vmatprep.subr.mxu0 0.0
  %124 = vmatpush1.msra.mxu0 0.0
  %125 = vmatprep.subr.mxu0 0.0
  %126 = vmatpush1.msra.mxu0 0.0
  %127 = vmatprep.subr.mxu0 0.0
  %128 = vmatpush1.msra.mxu0 0.0
  %129 = vmatprep.mubr.f32.mxu0 0.0
  %130 = vmatmul.mubr.f32.gmra.mrb[0].mxu0 %v20
  %v131 = vpop.f32.mrb[0].mxu0
  %v132 = vadd.f32 %v58, %v131
  %v133 = vpop.f32.mrb[0].mxu0
  %v134 = vadd.f32 %v62, %v133
  %135 = vdwg.mxu0
  %v136 = vmax.f32 %v132, 0.0
  %v137 = vmax.f32 %v134, 0.0
  %v138 = vld [vmem:[%s3] sm:$0xff]
  %v139 = vld [vmem:[%s3 + $0x8] sm:$0xff]
  %v140 = vld [vmem:[%s3 + $0x10] sm:$0xff]
  %v141 = vld [vmem:[%s3 + $0x18] sm:$0xff]
  %v142 = vld [vmem:[%s3 + $0x20] sm:$0xff]
  %v143 = vld [vmem:[%s3 + $0x28] sm:$0xff]
  %v144 = vld [vmem:[%s3 + $0x30] sm:$0xff]
  %v145 = vld [vmem:[%s3 + $0x38] sm:$0xff]
  %v146 = vld [vmem:[%s3 + $0x40] sm:$0xff]
  %v147 = vld [vmem:[%s3 + $0x48] sm:$0xff]
  %v148 = vld [vmem:[%s3 + $0x50] sm:$0xff]
  %v149 = vld [vmem:[%s3 + $0x58] sm:$0xff]
  %v150 = vld [vmem:[%s3 + $0x60] sm:$0xff]
  %v151 = vld [vmem:[%s3 + $0x68] sm:$0xff]
  %v152 = vld [vmem:[%s3 + $0x70] sm:$0xff]
  %v153 = vld [vmem:[%s3 + $0x78] sm:$0xff]
  %v154 = vld [vmem:[%s3 + $0x80] sm:$0xff]
  %v155 = vld [vmem:[%s3 + $0x88] sm:$0xff]
  %v156 = vld [vmem:[%s3 + $0x90] sm:$0xff]
  %v157 = vld [vmem:[%s3 + $0x98] sm:$0xff]
  %v158 = vld [vmem:[%s3 + $0xa0] sm:$0xff]
  %v159 = vld [vmem:[%s3 + $0xa8] sm:$0xff]
  %v160 = vld [vmem:[%s3 + $0xb0] sm:$0xff]
  %v161 = vld [vmem:[%s3 + $0xb8] sm:$0xff]
  %v162 = vld [vmem:[%s3 + $0xc0] sm:$0xff]
  %v163 = vld [vmem:[%s3 + $0xc8] sm:$0xff]
  %v164 = vld [vmem:[%s3 + $0xd0] sm:$0xff]
  %v165 = vld [vmem:[%s3 + $0xd8] sm:$0xff]
  %v166 = vld [vmem:[%s3 + $0xe0] sm:$0xff]
  %v167 = vld [vmem:[%s3 + $0xe8] sm:$0xff]
  %v168 = vld [vmem:[%s3 + $0xf0] sm:$0xff]
  %v169 = vld [vmem:[%s3 + $0xf8] sm:$0xff]
  %v170 = vld [vmem:[%s4] sm:$0x1]
  %v172 = vlaneseq
  %v173 = vshrl.u32 %v172, 7
  %v174 = vsub.s32 0, %v173
  %v175 = vrot.slane %v170, %v174
  %177 = vmatprep.subr.mxu0 0.0
  %178 = vmatpush1.msra.mxu0 %v138
  %179 = vmatprep.subr.mxu0 0.0
  %180 = vmatpush1.msra.mxu0 %v139
  %181 = vmatprep.subr.mxu0 0.0
  %182 = vmatpush1.msra.mxu0 %v140
  %183 = vmatprep.subr.mxu0 0.0
  %184 = vmatpush1.msra.mxu0 %v141
  %185 = vmatprep.subr.mxu0 0.0
  %186 = vmatpush1.msra.mxu0 %v142
  %187 = vmatprep.subr.mxu0 0.0
  %188 = vmatpush1.msra.mxu0 %v143
  %189 = vmatprep.subr.mxu0 0.0
  %190 = vmatpush1.msra.mxu0 %v144
  %191 = vmatprep.subr.mxu0 0.0
  %192 = vmatpush1.msra.mxu0 %v145
  %193 = vmatprep.subr.mxu0 0.0
  %194 = vmatpush1.msra.mxu0 %v146
  %195 = vmatprep.subr.mxu0 0.0
  %196 = vmatpush1.msra.mxu0 %v147
  %197 = vmatprep.subr.mxu0 0.0
  %198 = vmatpush1.msra.mxu0 %v148
  %199 = vmatprep.subr.mxu0 0.0
  %200 = vmatpush1.msra.mxu0 %v149
  %201 = vmatprep.subr.mxu0 0.0
  %202 = vmatpush1.msra.mxu0 %v150
  %203 = vmatprep.subr.mxu0 0.0
  %204 = vmatpush1.msra.mxu0 %v151
  %205 = vmatprep.subr.mxu0 0.0
  %206 = vmatpush1.msra.mxu0 %v152
  %207 = vmatprep.subr.mxu0 0.0
  %208 = vmatpush1.msra.mxu0 %v153
  %209 = vmatprep.subr.mxu0 0.0
  %210 = vmatpush1.msra.mxu0 %v154
  %211 = vmatprep.subr.mxu0 0.0
  %212 = vmatpush1.msra.mxu0 %v155
  %213 = vmatprep.subr.mxu0 0.0
  %214 = vmatpush1.msra.mxu0 %v156
  %215 = vmatprep.subr.mxu0 0.0
  %216 = vmatpush1.msra.mxu0 %v157
  %217 = vmatprep.subr.mxu0 0.0
  %218 = vmatpush1.msra.mxu0 %v158
  %219 = vmatprep.subr.mxu0 0.0
  %220 = vmatpush1.msra.mxu0 %v159
  %221 = vmatprep.subr.mxu0 0.0
  %222 = vmatpush1.msra.mxu0 %v160
  %223 = vmatprep.subr.mxu0 0.0
  %224 = vmatpush1.msra.mxu0 %v161
  %225 = vmatprep.subr.mxu0 0.0
  %226 = vmatpush1.msra.mxu0 %v162
  %227 = vmatprep.subr.mxu0 0.0
  %228 = vmatpush1.msra.mxu0 %v163
  %229 = vmatprep.subr.mxu0 0.0
  %230 = vmatpush1.msra.mxu0 %v164
  %231 = vmatprep.subr.mxu0 0.0
  %232 = vmatpush1.msra.mxu0 %v165
  %233 = vmatprep.subr.mxu0 0.0
  %234 = vmatpush1.msra.mxu0 %v166
  %235 = vmatprep.subr.mxu0 0.0
  %236 = vmatpush1.msra.mxu0 %v167
  %237 = vmatprep.subr.mxu0 0.0
  %238 = vmatpush1.msra.mxu0 %v168
  %239 = vmatprep.subr.mxu0 0.0
  %240 = vmatpush1.msra.mxu0 %v169
  %241 = vmatprep.mubr.f32.mxu0 %v137
  %242 = vmatmul.mubr.f32.gmra.mrb[0].mxu0 %v136
  %v243 = vpop.f32.mrb[0].mxu0
  %v244 = vadd.f32 %v175, %v243
  %v245 = vpop.f32.mrb[0].mxu0
  %246 = vdwg.mxu0
  %vm247 = vcmask 261120
  %248 = vst.msk [vmem:[%s5] sm:$0xff] %vm247, %v244
  // Predicated region
  $region22: #{traffic_mlp.1} parent=0 // pred_check
    _
  $region23: #{traffic_mlp.1} parent=0 // pred_check_branch
    %250 = sbr.rel (0) target = $region25
  $region24: #{traffic_mlp.1} parent=0 // pred_region
    _
  $region25: #{traffic_mlp.1} parent=0 // pred_fallthru
    _
  // Predicated region
  $region26: #{traffic_mlp.1} parent=0 // pred_check
    _
  $region27: #{traffic_mlp.1} parent=0 // pred_check_branch
    %252 = sbr.rel (0) target = $region29
  $region28: #{traffic_mlp.1} parent=0 // pred_region
    _
  $region29: #{traffic_mlp.1} parent=0 // pred_fallthru
    _

</llo_original>
